<compile_context>
chip_gen: v7x
topology: tpu7x:2x2x1
jax: 0.10.0
libtpu: 0.0.40
codegen_flags: <defaults>
</compile_context>

<pallas_src>
import jax
import jax.numpy as jnp
from jax.experimental import pallas as pl
from jax.experimental.pallas import tpu as pltpu

_LANES = 128
_SUBLANES = 8
_SLAB = _LANES * _SUBLANES   # 1024 batch elements == one full f32 vreg per feature row


def policy_mlp_kernel(x_ref, w1_ref, b1_ref, w2_ref, b2_ref, out_ref):
    """Fused affine1 -> tanh -> affine2 -> softmax, batch-in-lanes layout.

    x_ref  : (F, SB, 128) VMEM  -- feature-major batch tile (batch fills sublanes+lanes)
    w1_ref : (F*H,) SMEM        -- w1[k, j] at index k*H + j
    b1_ref : (H,)   SMEM
    w2_ref : (H*A,) SMEM        -- w2[j, a] at index j*A + a
    b2_ref : (A,)   SMEM
    out_ref: (A, SB, 128) VMEM  -- softmax probabilities, transposed
    """
    n_feat = x_ref.shape[0]
    n_hid = b1_ref.shape[0]
    n_act = b2_ref.shape[0]

    # Load each feature row once: full-density (SB, 128) slabs.
    x_rows = [x_ref[k, :, :] for k in range(n_feat)]

    # Layer 1 + tanh: fully unrolled scalar-weight FMA chains (VPU), tanh on the EUP.
    h = []
    for j in range(n_hid):
        acc = x_rows[0] * w1_ref[0 * n_hid + j] + b1_ref[j]
        for k in range(1, n_feat):
            acc = acc + x_rows[k] * w1_ref[k * n_hid + j]
        h.append(jnp.tanh(acc))

    # Layer 2: unrolled scalar-weight FMA chains.
    s = []
    for a in range(n_act):
        acc = h[0] * w2_ref[0 * n_act + a] + b2_ref[a]
        for j in range(1, n_hid):
            acc = acc + h[j] * w2_ref[j * n_act + a]
        s.append(acc)

    # Numerically stable softmax across the n_act rows: elementwise max/sum over a
    # tiny Python list (no cross-lane reductions).
    m = s[0]
    for a in range(1, n_act):
        m = jnp.maximum(m, s[a])
    e = [jnp.exp(s[a] - m) for a in range(n_act)]
    denom = e[0]
    for a in range(1, n_act):
        denom = denom + e[a]
    inv = pl.reciprocal(denom, approx=False)   # exact: probabilities sum to 1
    for a in range(n_act):
        out_ref[a, :, :] = e[a] * inv


def _choose_tile(batch_padded, block_b):
    """Pick a batch tile (multiple of _SLAB); prefer >= 2 grid steps for v7x's 2 TCs."""
    tb = min(block_b, batch_padded)
    if batch_padded // tb < 2 and batch_padded >= 2 * _SLAB:
        tb = max(_SLAB, (batch_padded // (2 * _SLAB)) * _SLAB)
    return tb


def policy_mlp_forward(x, w1, b1, w2, b2, *, block_b=2048, min_pallas_batch=1024):
    """probs = softmax(tanh(x @ w1 + b1) @ w2 + b2, axis=1); x: (B, F)."""
    x = x.astype(jnp.float32)
    B, F = x.shape
    H = w1.shape[1]
    A = w2.shape[1]

    w1 = w1.astype(jnp.float32)
    w2 = w2.astype(jnp.float32)
    b1 = b1.reshape(H).astype(jnp.float32)
    b2 = b2.reshape(A).astype(jnp.float32)

    # Tiny-batch fast path: rollout-sized inputs are cheaper as a plain fused XLA op.
    if B < min_pallas_batch:
        h = jnp.tanh(x @ w1 + b1)
        return jax.nn.softmax(h @ w2 + b2, axis=1)

    # --- batch-in-lanes layout: batch fills sublanes+lanes; features/actions on axis 0
    block_b = max(_SLAB, (block_b // _SLAB) * _SLAB)
    b_slabs = pl.cdiv(B, _SLAB) * _SLAB
    TB = _choose_tile(b_slabs, block_b)
    B_pad = pl.cdiv(B, TB) * TB
    SB = TB // _LANES                                   # sublane-rows per tile

    x_t = jnp.pad(x, ((0, B_pad - B), (0, 0))).T        # (F, B_pad), lane-dense
    x_t = x_t.reshape(F, B_pad // _LANES, _LANES)       # (F, rows, 128)

    w1_flat = w1.reshape(F * H)
    w2_flat = w2.reshape(H * A)

    smem = pl.BlockSpec(memory_space=pltpu.MemorySpace.SMEM)

    out3 = pl.pallas_call(
        policy_mlp_kernel,
        out_shape=jax.ShapeDtypeStruct((A, B_pad // _LANES, _LANES), jnp.float32),
        grid=(B_pad // TB,),
        in_specs=[
            pl.BlockSpec((F, SB, _LANES), lambda i: (0, i, 0)),   # x: tiled over batch
            smem, smem, smem, smem,                               # weights/biases in SMEM
        ],
        out_specs=pl.BlockSpec((A, SB, _LANES), lambda i: (0, i, 0)),
        compiler_params=pltpu.CompilerParams(
            dimension_semantics=("parallel",),          # v7x: batch split over 2 TCs
        ),
    )(x_t, w1_flat, b1, w2_flat, b2)

    return out3.reshape(A, B_pad)[:, :B].T              # (B, A)


def init_params(key, n_features, n_actions, hidden=10):
    # PyTorch nn.Linear default init: U(-1/sqrt(fan_in), 1/sqrt(fan_in)).
    # Weights already stored as (in, out) so the forward is x @ W + b.
    k1, k2, k3, k4 = jax.random.split(key, 4)
    bound1 = 1.0 / (n_features ** 0.5)
    bound2 = 1.0 / (hidden ** 0.5)
    w1 = jax.random.uniform(k1, (n_features, hidden), jnp.float32, -bound1, bound1)
    b1 = jax.random.uniform(k2, (hidden,), jnp.float32, -bound1, bound1)
    w2 = jax.random.uniform(k3, (hidden, n_actions), jnp.float32, -bound2, bound2)
    b2 = jax.random.uniform(k4, (n_actions,), jnp.float32, -bound2, bound2)
    return w1, b1, w2, b2


if __name__ == "__main__":
    key = jax.random.PRNGKey(0)
    kx, kp, ks = jax.random.split(key, 3)

    n_features = 4   # e.g. CartPole observation dim
    n_actions = 3
    w1, b1, w2, b2 = init_params(kp, n_features, n_actions)

    def reference(xx):
        h = jnp.tanh(xx @ w1 + b1)
        return jax.nn.softmax(h @ w2 + b2, axis=1)

    # --- Pallas path: batch large enough to tile (2 grid steps -> both v7x TCs) ---
    batch = 2048
    x = jax.random.normal(kx, (batch, n_features), jnp.float32)
    probs = jax.block_until_ready(policy_mlp_forward(x, w1, b1, w2, b2))
    ref = reference(x)
    assert probs.shape == (batch, n_actions)
    assert jnp.allclose(probs, ref, atol=1e-4, rtol=1e-4), "pallas path mismatch vs reference"
    assert jnp.allclose(jnp.sum(probs, axis=1), 1.0, atol=1e-4)

    # --- tiny-batch fast path (rollout-sized input) ---
    x_small = jax.random.normal(ks, (2, n_features), jnp.float32)
    probs_small = jax.block_until_ready(policy_mlp_forward(x_small, w1, b1, w2, b2))
    assert probs_small.shape == (2, n_actions)
    assert jnp.allclose(probs_small, reference(x_small), atol=1e-4, rtol=1e-4)

    print("KERNEL_OK")
</pallas_src>

<mosaic_0001>
module attributes {stable_mosaic.version = 11 : i64} {
  func.func @policy_mlp_kernel(%arg0: i32, %arg1: memref<4x8x128xf32, #tpu.memory_space<vmem>>, %arg2: memref<40xf32, #tpu.memory_space<smem>>, %arg3: memref<10xf32, #tpu.memory_space<smem>>, %arg4: memref<30xf32, #tpu.memory_space<smem>>, %arg5: memref<3xf32, #tpu.memory_space<smem>>, %arg6: memref<3x8x128xf32, #tpu.memory_space<vmem>>) attributes {dimension_semantics = [#tpu.dimension_semantics<parallel>], iteration_bounds = array<i64: 2>, scalar_prefetch = 0 : i64, scratch_operands = 0 : i64, tpu.core_type = #tpu.core_type<tc>, window_params = [{transform_indices = @transform_0, window_bounds = array<i64: 4, 8, 128>}, {transform_indices = @transform_1, window_bounds = array<i64: 40>}, {transform_indices = @transform_2, window_bounds = array<i64: 10>}, {transform_indices = @transform_3, window_bounds = array<i64: 30>}, {transform_indices = @transform_4, window_bounds = array<i64: 3>}, {transform_indices = @transform_5, window_bounds = array<i64: 3, 8, 128>}]} {
    %c0 = arith.constant 0 : index
    %c0_0 = arith.constant 0 : index
    %c0_1 = arith.constant 0 : index
    %0 = vector.load %arg1[%c0, %c0_0, %c0_1] : memref<4x8x128xf32, #tpu.memory_space<vmem>>, vector<1x8x128xf32>
    %1 = vector.shape_cast %0 : vector<1x8x128xf32> to vector<8x128xf32>
    %c1 = arith.constant 1 : index
    %c0_2 = arith.constant 0 : index
    %c0_3 = arith.constant 0 : index
    %2 = vector.load %arg1[%c1, %c0_2, %c0_3] : memref<4x8x128xf32, #tpu.memory_space<vmem>>, vector<1x8x128xf32>
    %3 = vector.shape_cast %2 : vector<1x8x128xf32> to vector<8x128xf32>
    %c2 = arith.constant 2 : index
    %c0_4 = arith.constant 0 : index
    %c0_5 = arith.constant 0 : index
    %4 = vector.load %arg1[%c2, %c0_4, %c0_5] : memref<4x8x128xf32, #tpu.memory_space<vmem>>, vector<1x8x128xf32>
    %5 = vector.shape_cast %4 : vector<1x8x128xf32> to vector<8x128xf32>
    %c3 = arith.constant 3 : index
    %c0_6 = arith.constant 0 : index
    %c0_7 = arith.constant 0 : index
    %6 = vector.load %arg1[%c3, %c0_6, %c0_7] : memref<4x8x128xf32, #tpu.memory_space<vmem>>, vector<1x8x128xf32>
    %7 = vector.shape_cast %6 : vector<1x8x128xf32> to vector<8x128xf32>
    %c0_8 = arith.constant 0 : index
    %8 = memref.load %arg2[%c0_8] : memref<40xf32, #tpu.memory_space<smem>>
    %9 = vector.broadcast %8 : f32 to vector<8x128xf32>
    %10 = arith.mulf %1, %9 : vector<8x128xf32>
    %c0_9 = arith.constant 0 : index
    %11 = memref.load %arg3[%c0_9] : memref<10xf32, #tpu.memory_space<smem>>
    %12 = vector.broadcast %11 : f32 to vector<8x128xf32>
    %13 = arith.addf %10, %12 : vector<8x128xf32>
    %c10 = arith.constant 10 : index
    %14 = memref.load %arg2[%c10] : memref<40xf32, #tpu.memory_space<smem>>
    %15 = vector.broadcast %14 : f32 to vector<8x128xf32>
    %16 = arith.mulf %3, %15 : vector<8x128xf32>
    %17 = arith.addf %13, %16 : vector<8x128xf32>
    %c20 = arith.constant 20 : index
    %18 = memref.load %arg2[%c20] : memref<40xf32, #tpu.memory_space<smem>>
    %19 = vector.broadcast %18 : f32 to vector<8x128xf32>
    %20 = arith.mulf %5, %19 : vector<8x128xf32>
    %21 = arith.addf %17, %20 : vector<8x128xf32>
    %c30 = arith.constant 30 : index
    %22 = memref.load %arg2[%c30] : memref<40xf32, #tpu.memory_space<smem>>
    %23 = vector.broadcast %22 : f32 to vector<8x128xf32>
    %24 = arith.mulf %7, %23 : vector<8x128xf32>
    %25 = arith.addf %21, %24 : vector<8x128xf32>
    %26 = math.tanh %25 : vector<8x128xf32>
    %c1_10 = arith.constant 1 : index
    %27 = memref.load %arg2[%c1_10] : memref<40xf32, #tpu.memory_space<smem>>
    %28 = vector.broadcast %27 : f32 to vector<8x128xf32>
    %29 = arith.mulf %1, %28 : vector<8x128xf32>
    %c1_11 = arith.constant 1 : index
    %30 = memref.load %arg3[%c1_11] : memref<10xf32, #tpu.memory_space<smem>>
    %31 = vector.broadcast %30 : f32 to vector<8x128xf32>
    %32 = arith.addf %29, %31 : vector<8x128xf32>
    %c11 = arith.constant 11 : index
    %33 = memref.load %arg2[%c11] : memref<40xf32, #tpu.memory_space<smem>>
    %34 = vector.broadcast %33 : f32 to vector<8x128xf32>
    %35 = arith.mulf %3, %34 : vector<8x128xf32>
    %36 = arith.addf %32, %35 : vector<8x128xf32>
    %c21 = arith.constant 21 : index
    %37 = memref.load %arg2[%c21] : memref<40xf32, #tpu.memory_space<smem>>
    %38 = vector.broadcast %37 : f32 to vector<8x128xf32>
    %39 = arith.mulf %5, %38 : vector<8x128xf32>
    %40 = arith.addf %36, %39 : vector<8x128xf32>
    %c31 = arith.constant 31 : index
    %41 = memref.load %arg2[%c31] : memref<40xf32, #tpu.memory_space<smem>>
    %42 = vector.broadcast %41 : f32 to vector<8x128xf32>
    %43 = arith.mulf %7, %42 : vector<8x128xf32>
    %44 = arith.addf %40, %43 : vector<8x128xf32>
    %45 = math.tanh %44 : vector<8x128xf32>
    %c2_12 = arith.constant 2 : index
    %46 = memref.load %arg2[%c2_12] : memref<40xf32, #tpu.memory_space<smem>>
    %47 = vector.broadcast %46 : f32 to vector<8x128xf32>
    %48 = arith.mulf %1, %47 : vector<8x128xf32>
    %c2_13 = arith.constant 2 : index
    %49 = memref.load %arg3[%c2_13] : memref<10xf32, #tpu.memory_space<smem>>
    %50 = vector.broadcast %49 : f32 to vector<8x128xf32>
    %51 = arith.addf %48, %50 : vector<8x128xf32>
    %c12 = arith.constant 12 : index
    %52 = memref.load %arg2[%c12] : memref<40xf32, #tpu.memory_space<smem>>
    %53 = vector.broadcast %52 : f32 to vector<8x128xf32>
    %54 = arith.mulf %3, %53 : vector<8x128xf32>
    %55 = arith.addf %51, %54 : vector<8x128xf32>
    %c22 = arith.constant 22 : index
    %56 = memref.load %arg2[%c22] : memref<40xf32, #tpu.memory_space<smem>>
    %57 = vector.broadcast %56 : f32 to vector<8x128xf32>
    %58 = arith.mulf %5, %57 : vector<8x128xf32>
    %59 = arith.addf %55, %58 : vector<8x128xf32>
    %c32 = arith.constant 32 : index
    %60 = memref.load %arg2[%c32] : memref<40xf32, #tpu.memory_space<smem>>
    %61 = vector.broadcast %60 : f32 to vector<8x128xf32>
    %62 = arith.mulf %7, %61 : vector<8x128xf32>
    %63 = arith.addf %59, %62 : vector<8x128xf32>
    %64 = math.tanh %63 : vector<8x128xf32>
    %c3_14 = arith.constant 3 : index
    %65 = memref.load %arg2[%c3_14] : memref<40xf32, #tpu.memory_space<smem>>
    %66 = vector.broadcast %65 : f32 to vector<8x128xf32>
    %67 = arith.mulf %1, %66 : vector<8x128xf32>
    %c3_15 = arith.constant 3 : index
    %68 = memref.load %arg3[%c3_15] : memref<10xf32, #tpu.memory_space<smem>>
    %69 = vector.broadcast %68 : f32 to vector<8x128xf32>
    %70 = arith.addf %67, %69 : vector<8x128xf32>
    %c13 = arith.constant 13 : index
    %71 = memref.load %arg2[%c13] : memref<40xf32, #tpu.memory_space<smem>>
    %72 = vector.broadcast %71 : f32 to vector<8x128xf32>
    %73 = arith.mulf %3, %72 : vector<8x128xf32>
    %74 = arith.addf %70, %73 : vector<8x128xf32>
    %c23 = arith.constant 23 : index
    %75 = memref.load %arg2[%c23] : memref<40xf32, #tpu.memory_space<smem>>
    %76 = vector.broadcast %75 : f32 to vector<8x128xf32>
    %77 = arith.mulf %5, %76 : vector<8x128xf32>
    %78 = arith.addf %74, %77 : vector<8x128xf32>
    %c33 = arith.constant 33 : index
    %79 = memref.load %arg2[%c33] : memref<40xf32, #tpu.memory_space<smem>>
    %80 = vector.broadcast %79 : f32 to vector<8x128xf32>
    %81 = arith.mulf %7, %80 : vector<8x128xf32>
    %82 = arith.addf %78, %81 : vector<8x128xf32>
    %83 = math.tanh %82 : vector<8x128xf32>
    %c4 = arith.constant 4 : index
    %84 = memref.load %arg2[%c4] : memref<40xf32, #tpu.memory_space<smem>>
    %85 = vector.broadcast %84 : f32 to vector<8x128xf32>
    %86 = arith.mulf %1, %85 : vector<8x128xf32>
    %c4_16 = arith.constant 4 : index
    %87 = memref.load %arg3[%c4_16] : memref<10xf32, #tpu.memory_space<smem>>
    %88 = vector.broadcast %87 : f32 to vector<8x128xf32>
    %89 = arith.addf %86, %88 : vector<8x128xf32>
    %c14 = arith.constant 14 : index
    %90 = memref.load %arg2[%c14] : memref<40xf32, #tpu.memory_space<smem>>
    %91 = vector.broadcast %90 : f32 to vector<8x128xf32>
    %92 = arith.mulf %3, %91 : vector<8x128xf32>
    %93 = arith.addf %89, %92 : vector<8x128xf32>
    %c24 = arith.constant 24 : index
    %94 = memref.load %arg2[%c24] : memref<40xf32, #tpu.memory_space<smem>>
    %95 = vector.broadcast %94 : f32 to vector<8x128xf32>
    %96 = arith.mulf %5, %95 : vector<8x128xf32>
    %97 = arith.addf %93, %96 : vector<8x128xf32>
    %c34 = arith.constant 34 : index
    %98 = memref.load %arg2[%c34] : memref<40xf32, #tpu.memory_space<smem>>
    %99 = vector.broadcast %98 : f32 to vector<8x128xf32>
    %100 = arith.mulf %7, %99 : vector<8x128xf32>
    %101 = arith.addf %97, %100 : vector<8x128xf32>
    %102 = math.tanh %101 : vector<8x128xf32>
    %c5 = arith.constant 5 : index
    %103 = memref.load %arg2[%c5] : memref<40xf32, #tpu.memory_space<smem>>
    %104 = vector.broadcast %103 : f32 to vector<8x128xf32>
    %105 = arith.mulf %1, %104 : vector<8x128xf32>
    %c5_17 = arith.constant 5 : index
    %106 = memref.load %arg3[%c5_17] : memref<10xf32, #tpu.memory_space<smem>>
    %107 = vector.broadcast %106 : f32 to vector<8x128xf32>
    %108 = arith.addf %105, %107 : vector<8x128xf32>
    %c15 = arith.constant 15 : index
    %109 = memref.load %arg2[%c15] : memref<40xf32, #tpu.memory_space<smem>>
    %110 = vector.broadcast %109 : f32 to vector<8x128xf32>
    %111 = arith.mulf %3, %110 : vector<8x128xf32>
    %112 = arith.addf %108, %111 : vector<8x128xf32>
    %c25 = arith.constant 25 : index
    %113 = memref.load %arg2[%c25] : memref<40xf32, #tpu.memory_space<smem>>
    %114 = vector.broadcast %113 : f32 to vector<8x128xf32>
    %115 = arith.mulf %5, %114 : vector<8x128xf32>
    %116 = arith.addf %112, %115 : vector<8x128xf32>
    %c35 = arith.constant 35 : index
    %117 = memref.load %arg2[%c35] : memref<40xf32, #tpu.memory_space<smem>>
    %118 = vector.broadcast %117 : f32 to vector<8x128xf32>
    %119 = arith.mulf %7, %118 : vector<8x128xf32>
    %120 = arith.addf %116, %119 : vector<8x128xf32>
    %121 = math.tanh %120 : vector<8x128xf32>
    %c6 = arith.constant 6 : index
    %122 = memref.load %arg2[%c6] : memref<40xf32, #tpu.memory_space<smem>>
    %123 = vector.broadcast %122 : f32 to vector<8x128xf32>
    %124 = arith.mulf %1, %123 : vector<8x128xf32>
    %c6_18 = arith.constant 6 : index
    %125 = memref.load %arg3[%c6_18] : memref<10xf32, #tpu.memory_space<smem>>
    %126 = vector.broadcast %125 : f32 to vector<8x128xf32>
    %127 = arith.addf %124, %126 : vector<8x128xf32>
    %c16 = arith.constant 16 : index
    %128 = memref.load %arg2[%c16] : memref<40xf32, #tpu.memory_space<smem>>
    %129 = vector.broadcast %128 : f32 to vector<8x128xf32>
    %130 = arith.mulf %3, %129 : vector<8x128xf32>
    %131 = arith.addf %127, %130 : vector<8x128xf32>
    %c26 = arith.constant 26 : index
    %132 = memref.load %arg2[%c26] : memref<40xf32, #tpu.memory_space<smem>>
    %133 = vector.broadcast %132 : f32 to vector<8x128xf32>
    %134 = arith.mulf %5, %133 : vector<8x128xf32>
    %135 = arith.addf %131, %134 : vector<8x128xf32>
    %c36 = arith.constant 36 : index
    %136 = memref.load %arg2[%c36] : memref<40xf32, #tpu.memory_space<smem>>
    %137 = vector.broadcast %136 : f32 to vector<8x128xf32>
    %138 = arith.mulf %7, %137 : vector<8x128xf32>
    %139 = arith.addf %135, %138 : vector<8x128xf32>
    %140 = math.tanh %139 : vector<8x128xf32>
    %c7 = arith.constant 7 : index
    %141 = memref.load %arg2[%c7] : memref<40xf32, #tpu.memory_space<smem>>
    %142 = vector.broadcast %141 : f32 to vector<8x128xf32>
    %143 = arith.mulf %1, %142 : vector<8x128xf32>
    %c7_19 = arith.constant 7 : index
    %144 = memref.load %arg3[%c7_19] : memref<10xf32, #tpu.memory_space<smem>>
    %145 = vector.broadcast %144 : f32 to vector<8x128xf32>
    %146 = arith.addf %143, %145 : vector<8x128xf32>
    %c17 = arith.constant 17 : index
    %147 = memref.load %arg2[%c17] : memref<40xf32, #tpu.memory_space<smem>>
    %148 = vector.broadcast %147 : f32 to vector<8x128xf32>
    %149 = arith.mulf %3, %148 : vector<8x128xf32>
    %150 = arith.addf %146, %149 : vector<8x128xf32>
    %c27 = arith.constant 27 : index
    %151 = memref.load %arg2[%c27] : memref<40xf32, #tpu.memory_space<smem>>
    %152 = vector.broadcast %151 : f32 to vector<8x128xf32>
    %153 = arith.mulf %5, %152 : vector<8x128xf32>
    %154 = arith.addf %150, %153 : vector<8x128xf32>
    %c37 = arith.constant 37 : index
    %155 = memref.load %arg2[%c37] : memref<40xf32, #tpu.memory_space<smem>>
    %156 = vector.broadcast %155 : f32 to vector<8x128xf32>
    %157 = arith.mulf %7, %156 : vector<8x128xf32>
    %158 = arith.addf %154, %157 : vector<8x128xf32>
    %159 = math.tanh %158 : vector<8x128xf32>
    %c8 = arith.constant 8 : index
    %160 = memref.load %arg2[%c8] : memref<40xf32, #tpu.memory_space<smem>>
    %161 = vector.broadcast %160 : f32 to vector<8x128xf32>
    %162 = arith.mulf %1, %161 : vector<8x128xf32>
    %c8_20 = arith.constant 8 : index
    %163 = memref.load %arg3[%c8_20] : memref<10xf32, #tpu.memory_space<smem>>
    %164 = vector.broadcast %163 : f32 to vector<8x128xf32>
    %165 = arith.addf %162, %164 : vector<8x128xf32>
    %c18 = arith.constant 18 : index
    %166 = memref.load %arg2[%c18] : memref<40xf32, #tpu.memory_space<smem>>
    %167 = vector.broadcast %166 : f32 to vector<8x128xf32>
    %168 = arith.mulf %3, %167 : vector<8x128xf32>
    %169 = arith.addf %165, %168 : vector<8x128xf32>
    %c28 = arith.constant 28 : index
    %170 = memref.load %arg2[%c28] : memref<40xf32, #tpu.memory_space<smem>>
    %171 = vector.broadcast %170 : f32 to vector<8x128xf32>
    %172 = arith.mulf %5, %171 : vector<8x128xf32>
    %173 = arith.addf %169, %172 : vector<8x128xf32>
    %c38 = arith.constant 38 : index
    %174 = memref.load %arg2[%c38] : memref<40xf32, #tpu.memory_space<smem>>
    %175 = vector.broadcast %174 : f32 to vector<8x128xf32>
    %176 = arith.mulf %7, %175 : vector<8x128xf32>
    %177 = arith.addf %173, %176 : vector<8x128xf32>
    %178 = math.tanh %177 : vector<8x128xf32>
    %c9 = arith.constant 9 : index
    %179 = memref.load %arg2[%c9] : memref<40xf32, #tpu.memory_space<smem>>
    %180 = vector.broadcast %179 : f32 to vector<8x128xf32>
    %181 = arith.mulf %1, %180 : vector<8x128xf32>
    %c9_21 = arith.constant 9 : index
    %182 = memref.load %arg3[%c9_21] : memref<10xf32, #tpu.memory_space<smem>>
    %183 = vector.broadcast %182 : f32 to vector<8x128xf32>
    %184 = arith.addf %181, %183 : vector<8x128xf32>
    %c19 = arith.constant 19 : index
    %185 = memref.load %arg2[%c19] : memref<40xf32, #tpu.memory_space<smem>>
    %186 = vector.broadcast %185 : f32 to vector<8x128xf32>
    %187 = arith.mulf %3, %186 : vector<8x128xf32>
    %188 = arith.addf %184, %187 : vector<8x128xf32>
    %c29 = arith.constant 29 : index
    %189 = memref.load %arg2[%c29] : memref<40xf32, #tpu.memory_space<smem>>
    %190 = vector.broadcast %189 : f32 to vector<8x128xf32>
    %191 = arith.mulf %5, %190 : vector<8x128xf32>
    %192 = arith.addf %188, %191 : vector<8x128xf32>
    %c39 = arith.constant 39 : index
    %193 = memref.load %arg2[%c39] : memref<40xf32, #tpu.memory_space<smem>>
    %194 = vector.broadcast %193 : f32 to vector<8x128xf32>
    %195 = arith.mulf %7, %194 : vector<8x128xf32>
    %196 = arith.addf %192, %195 : vector<8x128xf32>
    %197 = math.tanh %196 : vector<8x128xf32>
    %c0_22 = arith.constant 0 : index
    %198 = memref.load %arg4[%c0_22] : memref<30xf32, #tpu.memory_space<smem>>
    %199 = vector.broadcast %198 : f32 to vector<8x128xf32>
    %200 = arith.mulf %26, %199 : vector<8x128xf32>
    %c0_23 = arith.constant 0 : index
    %201 = memref.load %arg5[%c0_23] : memref<3xf32, #tpu.memory_space<smem>>
    %202 = vector.broadcast %201 : f32 to vector<8x128xf32>
    %203 = arith.addf %200, %202 : vector<8x128xf32>
    %c3_24 = arith.constant 3 : index
    %204 = memref.load %arg4[%c3_24] : memref<30xf32, #tpu.memory_space<smem>>
    %205 = vector.broadcast %204 : f32 to vector<8x128xf32>
    %206 = arith.mulf %45, %205 : vector<8x128xf32>
    %207 = arith.addf %203, %206 : vector<8x128xf32>
    %c6_25 = arith.constant 6 : index
    %208 = memref.load %arg4[%c6_25] : memref<30xf32, #tpu.memory_space<smem>>
    %209 = vector.broadcast %208 : f32 to vector<8x128xf32>
    %210 = arith.mulf %64, %209 : vector<8x128xf32>
    %211 = arith.addf %207, %210 : vector<8x128xf32>
    %c9_26 = arith.constant 9 : index
    %212 = memref.load %arg4[%c9_26] : memref<30xf32, #tpu.memory_space<smem>>
    %213 = vector.broadcast %212 : f32 to vector<8x128xf32>
    %214 = arith.mulf %83, %213 : vector<8x128xf32>
    %215 = arith.addf %211, %214 : vector<8x128xf32>
    %c12_27 = arith.constant 12 : index
    %216 = memref.load %arg4[%c12_27] : memref<30xf32, #tpu.memory_space<smem>>
    %217 = vector.broadcast %216 : f32 to vector<8x128xf32>
    %218 = arith.mulf %102, %217 : vector<8x128xf32>
    %219 = arith.addf %215, %218 : vector<8x128xf32>
    %c15_28 = arith.constant 15 : index
    %220 = memref.load %arg4[%c15_28] : memref<30xf32, #tpu.memory_space<smem>>
    %221 = vector.broadcast %220 : f32 to vector<8x128xf32>
    %222 = arith.mulf %121, %221 : vector<8x128xf32>
    %223 = arith.addf %219, %222 : vector<8x128xf32>
    %c18_29 = arith.constant 18 : index
    %224 = memref.load %arg4[%c18_29] : memref<30xf32, #tpu.memory_space<smem>>
    %225 = vector.broadcast %224 : f32 to vector<8x128xf32>
    %226 = arith.mulf %140, %225 : vector<8x128xf32>
    %227 = arith.addf %223, %226 : vector<8x128xf32>
    %c21_30 = arith.constant 21 : index
    %228 = memref.load %arg4[%c21_30] : memref<30xf32, #tpu.memory_space<smem>>
    %229 = vector.broadcast %228 : f32 to vector<8x128xf32>
    %230 = arith.mulf %159, %229 : vector<8x128xf32>
    %231 = arith.addf %227, %230 : vector<8x128xf32>
    %c24_31 = arith.constant 24 : index
    %232 = memref.load %arg4[%c24_31] : memref<30xf32, #tpu.memory_space<smem>>
    %233 = vector.broadcast %232 : f32 to vector<8x128xf32>
    %234 = arith.mulf %178, %233 : vector<8x128xf32>
    %235 = arith.addf %231, %234 : vector<8x128xf32>
    %c27_32 = arith.constant 27 : index
    %236 = memref.load %arg4[%c27_32] : memref<30xf32, #tpu.memory_space<smem>>
    %237 = vector.broadcast %236 : f32 to vector<8x128xf32>
    %238 = arith.mulf %197, %237 : vector<8x128xf32>
    %239 = arith.addf %235, %238 : vector<8x128xf32>
    %c1_33 = arith.constant 1 : index
    %240 = memref.load %arg4[%c1_33] : memref<30xf32, #tpu.memory_space<smem>>
    %241 = vector.broadcast %240 : f32 to vector<8x128xf32>
    %242 = arith.mulf %26, %241 : vector<8x128xf32>
    %c1_34 = arith.constant 1 : index
    %243 = memref.load %arg5[%c1_34] : memref<3xf32, #tpu.memory_space<smem>>
    %244 = vector.broadcast %243 : f32 to vector<8x128xf32>
    %245 = arith.addf %242, %244 : vector<8x128xf32>
    %c4_35 = arith.constant 4 : index
    %246 = memref.load %arg4[%c4_35] : memref<30xf32, #tpu.memory_space<smem>>
    %247 = vector.broadcast %246 : f32 to vector<8x128xf32>
    %248 = arith.mulf %45, %247 : vector<8x128xf32>
    %249 = arith.addf %245, %248 : vector<8x128xf32>
    %c7_36 = arith.constant 7 : index
    %250 = memref.load %arg4[%c7_36] : memref<30xf32, #tpu.memory_space<smem>>
    %251 = vector.broadcast %250 : f32 to vector<8x128xf32>
    %252 = arith.mulf %64, %251 : vector<8x128xf32>
    %253 = arith.addf %249, %252 : vector<8x128xf32>
    %c10_37 = arith.constant 10 : index
    %254 = memref.load %arg4[%c10_37] : memref<30xf32, #tpu.memory_space<smem>>
    %255 = vector.broadcast %254 : f32 to vector<8x128xf32>
    %256 = arith.mulf %83, %255 : vector<8x128xf32>
    %257 = arith.addf %253, %256 : vector<8x128xf32>
    %c13_38 = arith.constant 13 : index
    %258 = memref.load %arg4[%c13_38] : memref<30xf32, #tpu.memory_space<smem>>
    %259 = vector.broadcast %258 : f32 to vector<8x128xf32>
    %260 = arith.mulf %102, %259 : vector<8x128xf32>
    %261 = arith.addf %257, %260 : vector<8x128xf32>
    %c16_39 = arith.constant 16 : index
    %262 = memref.load %arg4[%c16_39] : memref<30xf32, #tpu.memory_space<smem>>
    %263 = vector.broadcast %262 : f32 to vector<8x128xf32>
    %264 = arith.mulf %121, %263 : vector<8x128xf32>
    %265 = arith.addf %261, %264 : vector<8x128xf32>
    %c19_40 = arith.constant 19 : index
    %266 = memref.load %arg4[%c19_40] : memref<30xf32, #tpu.memory_space<smem>>
    %267 = vector.broadcast %266 : f32 to vector<8x128xf32>
    %268 = arith.mulf %140, %267 : vector<8x128xf32>
    %269 = arith.addf %265, %268 : vector<8x128xf32>
    %c22_41 = arith.constant 22 : index
    %270 = memref.load %arg4[%c22_41] : memref<30xf32, #tpu.memory_space<smem>>
    %271 = vector.broadcast %270 : f32 to vector<8x128xf32>
    %272 = arith.mulf %159, %271 : vector<8x128xf32>
    %273 = arith.addf %269, %272 : vector<8x128xf32>
    %c25_42 = arith.constant 25 : index
    %274 = memref.load %arg4[%c25_42] : memref<30xf32, #tpu.memory_space<smem>>
    %275 = vector.broadcast %274 : f32 to vector<8x128xf32>
    %276 = arith.mulf %178, %275 : vector<8x128xf32>
    %277 = arith.addf %273, %276 : vector<8x128xf32>
    %c28_43 = arith.constant 28 : index
    %278 = memref.load %arg4[%c28_43] : memref<30xf32, #tpu.memory_space<smem>>
    %279 = vector.broadcast %278 : f32 to vector<8x128xf32>
    %280 = arith.mulf %197, %279 : vector<8x128xf32>
    %281 = arith.addf %277, %280 : vector<8x128xf32>
    %c2_44 = arith.constant 2 : index
    %282 = memref.load %arg4[%c2_44] : memref<30xf32, #tpu.memory_space<smem>>
    %283 = vector.broadcast %282 : f32 to vector<8x128xf32>
    %284 = arith.mulf %26, %283 : vector<8x128xf32>
    %c2_45 = arith.constant 2 : index
    %285 = memref.load %arg5[%c2_45] : memref<3xf32, #tpu.memory_space<smem>>
    %286 = vector.broadcast %285 : f32 to vector<8x128xf32>
    %287 = arith.addf %284, %286 : vector<8x128xf32>
    %c5_46 = arith.constant 5 : index
    %288 = memref.load %arg4[%c5_46] : memref<30xf32, #tpu.memory_space<smem>>
    %289 = vector.broadcast %288 : f32 to vector<8x128xf32>
    %290 = arith.mulf %45, %289 : vector<8x128xf32>
    %291 = arith.addf %287, %290 : vector<8x128xf32>
    %c8_47 = arith.constant 8 : index
    %292 = memref.load %arg4[%c8_47] : memref<30xf32, #tpu.memory_space<smem>>
    %293 = vector.broadcast %292 : f32 to vector<8x128xf32>
    %294 = arith.mulf %64, %293 : vector<8x128xf32>
    %295 = arith.addf %291, %294 : vector<8x128xf32>
    %c11_48 = arith.constant 11 : index
    %296 = memref.load %arg4[%c11_48] : memref<30xf32, #tpu.memory_space<smem>>
    %297 = vector.broadcast %296 : f32 to vector<8x128xf32>
    %298 = arith.mulf %83, %297 : vector<8x128xf32>
    %299 = arith.addf %295, %298 : vector<8x128xf32>
    %c14_49 = arith.constant 14 : index
    %300 = memref.load %arg4[%c14_49] : memref<30xf32, #tpu.memory_space<smem>>
    %301 = vector.broadcast %300 : f32 to vector<8x128xf32>
    %302 = arith.mulf %102, %301 : vector<8x128xf32>
    %303 = arith.addf %299, %302 : vector<8x128xf32>
    %c17_50 = arith.constant 17 : index
    %304 = memref.load %arg4[%c17_50] : memref<30xf32, #tpu.memory_space<smem>>
    %305 = vector.broadcast %304 : f32 to vector<8x128xf32>
    %306 = arith.mulf %121, %305 : vector<8x128xf32>
    %307 = arith.addf %303, %306 : vector<8x128xf32>
    %c20_51 = arith.constant 20 : index
    %308 = memref.load %arg4[%c20_51] : memref<30xf32, #tpu.memory_space<smem>>
    %309 = vector.broadcast %308 : f32 to vector<8x128xf32>
    %310 = arith.mulf %140, %309 : vector<8x128xf32>
    %311 = arith.addf %307, %310 : vector<8x128xf32>
    %c23_52 = arith.constant 23 : index
    %312 = memref.load %arg4[%c23_52] : memref<30xf32, #tpu.memory_space<smem>>
    %313 = vector.broadcast %312 : f32 to vector<8x128xf32>
    %314 = arith.mulf %159, %313 : vector<8x128xf32>
    %315 = arith.addf %311, %314 : vector<8x128xf32>
    %c26_53 = arith.constant 26 : index
    %316 = memref.load %arg4[%c26_53] : memref<30xf32, #tpu.memory_space<smem>>
    %317 = vector.broadcast %316 : f32 to vector<8x128xf32>
    %318 = arith.mulf %178, %317 : vector<8x128xf32>
    %319 = arith.addf %315, %318 : vector<8x128xf32>
    %c29_54 = arith.constant 29 : index
    %320 = memref.load %arg4[%c29_54] : memref<30xf32, #tpu.memory_space<smem>>
    %321 = vector.broadcast %320 : f32 to vector<8x128xf32>
    %322 = arith.mulf %197, %321 : vector<8x128xf32>
    %323 = arith.addf %319, %322 : vector<8x128xf32>
    %324 = arith.maximumf %239, %281 : vector<8x128xf32>
    %325 = arith.maximumf %324, %323 : vector<8x128xf32>
    %326 = arith.subf %239, %325 : vector<8x128xf32>
    %327 = math.exp %326 : vector<8x128xf32>
    %328 = arith.subf %281, %325 : vector<8x128xf32>
    %329 = math.exp %328 : vector<8x128xf32>
    %330 = arith.subf %323, %325 : vector<8x128xf32>
    %331 = math.exp %330 : vector<8x128xf32>
    %332 = arith.addf %327, %329 : vector<8x128xf32>
    %333 = arith.addf %332, %331 : vector<8x128xf32>
    %334 = tpu.reciprocal %333 : vector<8x128xf32> -> vector<8x128xf32>
    %335 = arith.mulf %327, %334 : vector<8x128xf32>
    %c0_55 = arith.constant 0 : index
    %c0_56 = arith.constant 0 : index
    %c0_57 = arith.constant 0 : index
    %336 = vector.load %arg6[%c0_55, %c0_56, %c0_57] : memref<3x8x128xf32, #tpu.memory_space<vmem>>, vector<1x8x128xf32>
    %337 = vector.shape_cast %336 : vector<1x8x128xf32> to vector<8x128xf32>
    %338 = vector.shape_cast %335 : vector<8x128xf32> to vector<1x8x128xf32>
    tpu.vector_store %arg6[%c0_55, %c0_56, %c0_57], %338 {strides = array<i32>} : memref<3x8x128xf32, #tpu.memory_space<vmem>>, vector<1x8x128xf32>,
    %339 = arith.mulf %329, %334 : vector<8x128xf32>
    %c1_58 = arith.constant 1 : index
    %c0_59 = arith.constant 0 : index
    %c0_60 = arith.constant 0 : index
    %340 = vector.load %arg6[%c1_58, %c0_59, %c0_60] : memref<3x8x128xf32, #tpu.memory_space<vmem>>, vector<1x8x128xf32>
    %341 = vector.shape_cast %340 : vector<1x8x128xf32> to vector<8x128xf32>
    %342 = vector.shape_cast %339 : vector<8x128xf32> to vector<1x8x128xf32>
    tpu.vector_store %arg6[%c1_58, %c0_59, %c0_60], %342 {strides = array<i32>} : memref<3x8x128xf32, #tpu.memory_space<vmem>>, vector<1x8x128xf32>,
    %343 = arith.mulf %331, %334 : vector<8x128xf32>
    %c2_61 = arith.constant 2 : index
    %c0_62 = arith.constant 0 : index
    %c0_63 = arith.constant 0 : index
    %344 = vector.load %arg6[%c2_61, %c0_62, %c0_63] : memref<3x8x128xf32, #tpu.memory_space<vmem>>, vector<1x8x128xf32>
    %345 = vector.shape_cast %344 : vector<1x8x128xf32> to vector<8x128xf32>
    %346 = vector.shape_cast %343 : vector<8x128xf32> to vector<1x8x128xf32>
    tpu.vector_store %arg6[%c2_61, %c0_62, %c0_63], %346 {strides = array<i32>} : memref<3x8x128xf32, #tpu.memory_space<vmem>>, vector<1x8x128xf32>,
    return
  }
  func.func @transform_0(%arg0: i32) -> (i32, i32, i32) {
    %c0_i32 = arith.constant 0 : i32
    %c0_i32_0 = arith.constant 0 : i32
    %c0_i32_1 = arith.constant 0 : i32
    return %c0_i32, %arg0, %c0_i32_0 : i32, i32, i32
  }
  func.func @transform_1(%arg0: i32) -> i32 {
    %c0_i32 = arith.constant 0 : i32
    %c0_i32_0 = arith.constant 0 : i32
    return %c0_i32 : i32
  }
  func.func @transform_2(%arg0: i32) -> i32 {
    %c0_i32 = arith.constant 0 : i32
    %c0_i32_0 = arith.constant 0 : i32
    return %c0_i32 : i32
  }
  func.func @transform_3(%arg0: i32) -> i32 {
    %c0_i32 = arith.constant 0 : i32
    %c0_i32_0 = arith.constant 0 : i32
    return %c0_i32 : i32
  }
  func.func @transform_4(%arg0: i32) -> i32 {
    %c0_i32 = arith.constant 0 : i32
    %c0_i32_0 = arith.constant 0 : i32
    return %c0_i32 : i32
  }
  func.func @transform_5(%arg0: i32) -> (i32, i32, i32) {
    %c0_i32 = arith.constant 0 : i32
    %c0_i32_0 = arith.constant 0 : i32
    %c0_i32_1 = arith.constant 0 : i32
    return %c0_i32, %arg0, %c0_i32_0 : i32, i32, i32
  }
}

</mosaic_0001>

<llo_original>
// kernel: tpu_custom_call.1
$region0: #{tpu_custom_call.1}
  #allocation0 [shape = 'u32[]', space=smem, size = 0x4, offset = 0x4, fixed_abs, tag = 'smem constant byte address 0x4 - core index']
  #allocation1 [shape = 'u32[144,128]{1,0:T(1,128)}', space=vmem, size = 0x12000, scoped, tag = 'internal scratch']
  %s0 = inlined_call_operand.hbm [shape: f32[4,16,128], index: 0, kind: input, shape index: {}]
  %s1 = inlined_call_operand.vmem [shape: f32[40], index: 1, kind: input, shape index: {}]
  %s2 = inlined_call_operand.vmem [shape: f32[10], index: 2, kind: input, shape index: {}]
  %s3 = inlined_call_operand.vmem [shape: f32[30], index: 3, kind: input, shape index: {}]
  %s4 = inlined_call_operand.vmem [shape: f32[3], index: 4, kind: input, shape index: {}]
  %s5 = inlined_call_operand.hbm [shape: f32[3,16,128], index: 5, kind: output, shape index: {}]
  %s6 = sld [smem:[#allocation0]]
  $region73: #{tpu_custom_call.1} parent=0
    _
  %s8 = ssub.s32 1, %s6
  %s9 = scalar_select 0, %s8, %s6
  $region1: #{tpu_custom_call.1} parent=0
    #allocation2 [shape = 'u8[32768]{0}', space=vmem, size = 0x8000, scoped, tag = 'input window, operand 0']
    #allocation3 [shape = 's32[2]{0}', space=sflag, size = 0x8, scoped, tag = 'scoped memory for tpu_custom_call.1']
    #allocation4 [shape = 's32[2]{0}', space=sflag, size = 0x8, scoped, tag = 'scoped memory for tpu_custom_call.1']
    #allocation5 [shape = 's32[2]{0}', space=sflag, size = 0x8, scoped, tag = 'scoped memory for tpu_custom_call.1']
    #allocation6 [shape = 'u8[512]{0}', space=smem, size = 0x200, scoped, tag = 'input window, operand 1, single buffered']
    #allocation7 [shape = 'u8[512]{0}', space=smem, size = 0x200, scoped, tag = 'input window, operand 2, single buffered']
    #allocation8 [shape = 's32[1]{0}', space=sflag, size = 0x4, scoped, tag = 'scoped memory for tpu_custom_call.1']
    #allocation9 [shape = 'u8[512]{0}', space=smem, size = 0x200, scoped, tag = 'input window, operand 3, single buffered']
    #allocation10 [shape = 'u8[512]{0}', space=smem, size = 0x200, scoped, tag = 'input window, operand 4, single buffered']
    #allocation11 [shape = 's32[1]{0}', space=sflag, size = 0x4, scoped, tag = 'scoped memory for tpu_custom_call.1']
    #allocation12 [shape = 'u8[24576]{0}', space=vmem, size = 0x6000, scoped, tag = 'output window, operand 0']
    %10 = vsyncpa [#allocation3], 0
    %s11 = scalar_lea.sflag [#allocation3], 1
    %12 = vsyncpa %s11, 0
    %13 = vsyncpa [#allocation5], 0
    %14 = vsyncpa [#allocation8], 0
    %15 = vsyncpa [#allocation11], 0
    %16 = vsyncpa [#allocation4], 0
    %s17 = scalar_lea.sflag [#allocation4], 1
    %18 = vsyncpa %s17, 0
    loop: start=0, step=1, limit=4
    $region2: #{tpu_custom_call.1} parent=1 // loop_pre_header
      _
    $region3: #{tpu_custom_call.1} parent=1 // loop_header
      %s20 = sphi 0, %s24
      %p21 = scmp.ge.s32.totalorder %s20, 4
      %s30 = sphi 0, %s32
      %s33 = sphi 0, %s30
      %s34 = sphi 0, %s33
      %s50 = sphi 0, %s34
      %s54 = sphi 0, %s54
      %s56 = sphi 0, %s54
      %s57 = sphi 0, %s56
      %s71 = sphi 0, %s57
      %s75 = sphi 0, %s75
      %s77 = sphi 0, %s75
      %s78 = sphi 0, %s77
      %s92 = sphi 0, %s78
      %s96 = sphi 0, %s96
      %s98 = sphi 0, %s96
      %s99 = sphi 0, %s98
      %s113 = sphi 0, %s99
      %s117 = sphi 0, %s117
      %s119 = sphi 0, %s117
      %s120 = sphi 0, %s119
      %s134 = sphi 0, %s120
      %s140 = sphi 0, %s142
      %s143 = sphi 0, %s140
      %s144 = sphi 0, %s143
      %s160 = sphi 0, %s144
    $region4: #{tpu_custom_call.1} parent=1 // loop_header_branch
      %23 = sbr.rel (%p21) target = $region8
    $region5: #{tpu_custom_call.1} parent=1 // loop_body
      %s25 = ssub.s32 %s20, 1
      %s26 = ssub.s32 %s20, 2
      %s27 = sadd.s32 %s20, 1
      %s28 = ssub.s32 %s20, %s27
      %p29 = scmp.eq.s32.totalorder %s28, 0
      %s31 = sadd.s32 %s30, 1
      %s32 = scalar_select %p29, %s30, %s31
      %p35 = pneg %p29
      %p36 = scmp.eq.s32.totalorder %s20, 1
      %p37 = por %p35, %p36
      %p38 = scmp.ne.s32.totalorder %s30, %s33
      %p39 = scmp.eq.s32.totalorder %s20, 0
      %p40 = por %p38, %p39
      %p41 = scmp.ne.s32.totalorder %s30, %s33
      %p42 = scmp.eq.s32.totalorder %s25, 1
      %p43 = por %p41, %p42
      %p44 = scmp.ne.s32.totalorder %s33, %s34
      %p45 = scmp.eq.s32.totalorder %s25, 0
      %p46 = por %p44, %p45
      %p47 = scmp.ne.s32.totalorder %s33, %s34
      %p48 = scmp.eq.s32.totalorder %s26, 1
      %p49 = por %p47, %p48
      %p51 = scmp.ne.s32.totalorder %s34, %s50
      %p52 = scmp.eq.s32.totalorder %s26, 0
      %p53 = por %p51, %p52
      %s55 = sadd.s32 %s54, 1
      %p58 = scmp.eq.s32.totalorder %s20, 1
      %p59 = scmp.ne.s32.totalorder %s54, %s56
      %p60 = scmp.eq.s32.totalorder %s20, 0
      %p61 = por %p59, %p60
      %p62 = scmp.ne.s32.totalorder %s54, %s56
      %p63 = scmp.eq.s32.totalorder %s25, 1
      %p64 = por %p62, %p63
      %p65 = scmp.ne.s32.totalorder %s56, %s57
      %p66 = scmp.eq.s32.totalorder %s25, 0
      %p67 = por %p65, %p66
      %p68 = scmp.ne.s32.totalorder %s56, %s57
      %p69 = scmp.eq.s32.totalorder %s26, 1
      %p70 = por %p68, %p69
      %p72 = scmp.ne.s32.totalorder %s57, %s71
      %p73 = scmp.eq.s32.totalorder %s26, 0
      %p74 = por %p72, %p73
      %s76 = sadd.s32 %s75, 1
      %p79 = scmp.eq.s32.totalorder %s20, 1
      %p80 = scmp.ne.s32.totalorder %s75, %s77
      %p81 = scmp.eq.s32.totalorder %s20, 0
      %p82 = por %p80, %p81
      %p83 = scmp.ne.s32.totalorder %s75, %s77
      %p84 = scmp.eq.s32.totalorder %s25, 1
      %p85 = por %p83, %p84
      %p86 = scmp.ne.s32.totalorder %s77, %s78
      %p87 = scmp.eq.s32.totalorder %s25, 0
      %p88 = por %p86, %p87
      %p89 = scmp.ne.s32.totalorder %s77, %s78
      %p90 = scmp.eq.s32.totalorder %s26, 1
      %p91 = por %p89, %p90
      %p93 = scmp.ne.s32.totalorder %s78, %s92
      %p94 = scmp.eq.s32.totalorder %s26, 0
      %p95 = por %p93, %p94
      %s97 = sadd.s32 %s96, 1
      %p100 = scmp.eq.s32.totalorder %s20, 1
      %p101 = scmp.ne.s32.totalorder %s96, %s98
      %p102 = scmp.eq.s32.totalorder %s20, 0
      %p103 = por %p101, %p102
      %p104 = scmp.ne.s32.totalorder %s96, %s98
      %p105 = scmp.eq.s32.totalorder %s25, 1
      %p106 = por %p104, %p105
      %p107 = scmp.ne.s32.totalorder %s98, %s99
      %p108 = scmp.eq.s32.totalorder %s25, 0
      %p109 = por %p107, %p108
      %p110 = scmp.ne.s32.totalorder %s98, %s99
      %p111 = scmp.eq.s32.totalorder %s26, 1
      %p112 = por %p110, %p111
      %p114 = scmp.ne.s32.totalorder %s99, %s113
      %p115 = scmp.eq.s32.totalorder %s26, 0
      %p116 = por %p114, %p115
      %s118 = sadd.s32 %s117, 1
      %p121 = scmp.eq.s32.totalorder %s20, 1
      %p122 = scmp.ne.s32.totalorder %s117, %s119
      %p123 = scmp.eq.s32.totalorder %s20, 0
      %p124 = por %p122, %p123
      %p125 = scmp.ne.s32.totalorder %s117, %s119
      %p126 = scmp.eq.s32.totalorder %s25, 1
      %p127 = por %p125, %p126
      %p128 = scmp.ne.s32.totalorder %s119, %s120
      %p129 = scmp.eq.s32.totalorder %s25, 0
      %p130 = por %p128, %p129
      %p131 = scmp.ne.s32.totalorder %s119, %s120
      %p132 = scmp.eq.s32.totalorder %s26, 1
      %p133 = por %p131, %p132
      %p135 = scmp.ne.s32.totalorder %s120, %s134
      %p136 = scmp.eq.s32.totalorder %s26, 0
      %p137 = por %p135, %p136
      %s138 = ssub.s32 %s20, %s27
      %p139 = scmp.eq.s32.totalorder %s138, 0
      %s141 = sadd.s32 %s140, 1
      %s142 = scalar_select %p139, %s140, %s141
      %p145 = pneg %p139
      %p146 = scmp.eq.s32.totalorder %s20, 1
      %p147 = por %p145, %p146
      %p148 = scmp.ne.s32.totalorder %s140, %s143
      %p149 = scmp.eq.s32.totalorder %s20, 0
      %p150 = por %p148, %p149
      %p151 = scmp.ne.s32.totalorder %s140, %s143
      %p152 = scmp.eq.s32.totalorder %s25, 1
      %p153 = por %p151, %p152
      %p154 = scmp.ne.s32.totalorder %s143, %s144
      %p155 = scmp.eq.s32.totalorder %s25, 0
      %p156 = por %p154, %p155
      %p157 = scmp.ne.s32.totalorder %s143, %s144
      %p158 = scmp.eq.s32.totalorder %s26, 1
      %p159 = por %p157, %p158
      %p161 = scmp.ne.s32.totalorder %s144, %s160
      %p162 = scmp.eq.s32.totalorder %s26, 0
      %p163 = por %p161, %p162
      %p164 = scmp.le.s32.totalorder 1, %s20
      %p165 = scmp.lt.s32.totalorder %s20, 3
      %p166 = pnand %p164, %p165
      %p167 = pneg %p166
      // Predicated region
      $region9: #{tpu_custom_call.1} parent=5 // pred_check
        _
      $region10: #{tpu_custom_call.1} parent=5 // pred_check_branch
        %169 = sbr.rel (%p166) target = $region12
      $region11: #{tpu_custom_call.1} parent=5 // pred_region
        %s170 = ssub.s32 %s20, 1
        // Predicated region
        $region13: #{tpu_custom_call.1} parent=11 // pred_check
          %p171 = pneg %p67
        $region14: #{tpu_custom_call.1} parent=11 // pred_check_branch
          %173 = sbr.rel (%p171) target = $region16
        $region15: #{tpu_custom_call.1} parent=11 // pred_region
          %s175 = ssub.s32 16, 16
          %176 = vsyncadd [#allocation5], %s175
          %s178 = sshll.u32 %s1, 4
          %s179 = int_to_ptr.vmem [resolvable:$true] %s178
          %181 = dma.vmem_to_smem %s179, 16, [#allocation6], [#allocation5]
        $region16: #{tpu_custom_call.1} parent=11 // pred_fallthru
          _
        // Predicated region
        $region17: #{tpu_custom_call.1} parent=11 // pred_check
          %p182 = pneg %p88
        $region18: #{tpu_custom_call.1} parent=11 // pred_check_branch
          %184 = sbr.rel (%p182) target = $region20
        $region19: #{tpu_custom_call.1} parent=11 // pred_region
          %s186 = ssub.s32 16, 16
          %187 = vsyncadd [#allocation8], %s186
          %s189 = sshll.u32 %s2, 4
          %s190 = int_to_ptr.vmem [resolvable:$true] %s189
          %192 = dma.vmem_to_smem %s190, 16, [#allocation7], [#allocation8]
        $region20: #{tpu_custom_call.1} parent=11 // pred_fallthru
          _
        // Predicated region
        $region21: #{tpu_custom_call.1} parent=11 // pred_check
          %p193 = pneg %p109
        $region22: #{tpu_custom_call.1} parent=11 // pred_check_branch
          %195 = sbr.rel (%p193) target = $region24
        $region23: #{tpu_custom_call.1} parent=11 // pred_region
          %s197 = ssub.s32 16, 16
          %198 = vsyncadd [#allocation8], %s197
          %s200 = sshll.u32 %s3, 4
          %s201 = int_to_ptr.vmem [resolvable:$true] %s200
          %203 = dma.vmem_to_smem %s201, 16, [#allocation9], [#allocation8]
        $region24: #{tpu_custom_call.1} parent=11 // pred_fallthru
          _
        // Predicated region
        $region25: #{tpu_custom_call.1} parent=11 // pred_check
          %p204 = pneg %p130
        $region26: #{tpu_custom_call.1} parent=11 // pred_check_branch
          %206 = sbr.rel (%p204) target = $region28
        $region27: #{tpu_custom_call.1} parent=11 // pred_region
          %s208 = ssub.s32 16, 16
          %209 = vsyncadd [#allocation11], %s208
          %s211 = sshll.u32 %s4, 4
          %s212 = int_to_ptr.vmem [resolvable:$true] %s211
          %214 = dma.vmem_to_smem %s212, 16, [#allocation10], [#allocation11]
        $region28: #{tpu_custom_call.1} parent=11 // pred_fallthru
          _
      $region12: #{tpu_custom_call.1} parent=5 // pred_fallthru
        _
      %p215 = scmp.lt.s32.totalorder %s20, 2
      // Predicated region
      $region29: #{tpu_custom_call.1} parent=5 // pred_check
        %p216 = pneg %p215
      $region30: #{tpu_custom_call.1} parent=5 // pred_check_branch
        %218 = sbr.rel (%p216) target = $region32
      $region31: #{tpu_custom_call.1} parent=5 // pred_region
        // Predicated region
        $region33: #{tpu_custom_call.1} parent=31 // pred_check
          %p219 = pneg %p40
        $region34: #{tpu_custom_call.1} parent=31 // pred_check_branch
          %221 = sbr.rel (%p219) target = $region36
        $region35: #{tpu_custom_call.1} parent=31 // pred_region
          %s222 = sand.u32 %s30, 1
          %s223 = scalar_lea.sflag [#allocation3], %s222
          %s224 = sand.u32 %s30, 1
          %s225 = smul.addr %s224, 32
          %s226 = scalar_lea.vmem [#allocation2], %s225
          %s228 = ssub.s32 512, 512
          %229 = vsyncadd %s223, %s228
          %s230 = smul.addr %s20, 128
          %s231 = scalar_lea.hbm %s0, %s230
          %s232 = sshll.u32 %s226, 4
          %s233 = int_to_ptr.vmem [resolvable:$true] %s232
          %238 = dma.hbm_to_vmem [thread:$0]  %s231, 512, %s233, %s223, 256, 128, 8
        $region36: #{tpu_custom_call.1} parent=31 // pred_fallthru
          _
      $region32: #{tpu_custom_call.1} parent=5 // pred_fallthru
        _
      %p239 = scmp.le.s32.totalorder 1, %s20
      %p240 = scmp.lt.s32.totalorder %s20, 3
      %p241 = pnand %p239, %p240
      %p242 = pneg %p241
      // Predicated region
      $region37: #{tpu_custom_call.1} parent=5 // pred_check
        _
      $region38: #{tpu_custom_call.1} parent=5 // pred_check_branch
        %244 = sbr.rel (%p241) target = $region40
      $region39: #{tpu_custom_call.1} parent=5 // pred_region
        %s245 = ssub.s32 %s20, 1
        %s246 = sand.u32 %s33, 1
        %s247 = scalar_lea.sflag [#allocation3], %s246
        %s248 = sand.u32 %s33, 1
        %s249 = smul.addr %s248, 32
        %s250 = scalar_lea.vmem [#allocation2], %s249
        // Predicated region
        $region41: #{tpu_custom_call.1} parent=39 // pred_check
          %p251 = pneg %p46
        $region42: #{tpu_custom_call.1} parent=39 // pred_check_branch
          %253 = sbr.rel (%p251) target = $region44
        $region43: #{tpu_custom_call.1} parent=39 // pred_region
          %254 = dma.done %s247, 512
        $region44: #{tpu_custom_call.1} parent=39 // pred_fallthru
          _
        // Predicated region
        $region45: #{tpu_custom_call.1} parent=39 // pred_check
          %p255 = pneg %p67
        $region46: #{tpu_custom_call.1} parent=39 // pred_check_branch
          %257 = sbr.rel (%p255) target = $region48
        $region47: #{tpu_custom_call.1} parent=39 // pred_region
          %258 = dma.done [#allocation5], 16
        $region48: #{tpu_custom_call.1} parent=39 // pred_fallthru
          _
        // Predicated region
        $region49: #{tpu_custom_call.1} parent=39 // pred_check
          %p259 = pneg %p88
        $region50: #{tpu_custom_call.1} parent=39 // pred_check_branch
          %261 = sbr.rel (%p259) target = $region52
        $region51: #{tpu_custom_call.1} parent=39 // pred_region
          %262 = dma.done [#allocation8], 16
        $region52: #{tpu_custom_call.1} parent=39 // pred_fallthru
          _
        // Predicated region
        $region53: #{tpu_custom_call.1} parent=39 // pred_check
          %p263 = pneg %p109
        $region54: #{tpu_custom_call.1} parent=39 // pred_check_branch
          %265 = sbr.rel (%p263) target = $region56
        $region55: #{tpu_custom_call.1} parent=39 // pred_region
          %266 = dma.done [#allocation8], 16
        $region56: #{tpu_custom_call.1} parent=39 // pred_fallthru
          _
        // Predicated region
        $region57: #{tpu_custom_call.1} parent=39 // pred_check
          %p267 = pneg %p130
        $region58: #{tpu_custom_call.1} parent=39 // pred_check_branch
          %269 = sbr.rel (%p267) target = $region60
        $region59: #{tpu_custom_call.1} parent=39 // pred_region
          %270 = dma.done [#allocation11], 16
        $region60: #{tpu_custom_call.1} parent=39 // pred_fallthru
          _
        %271 = sfence
        %s272 = sand.u32 %s33, 1
        %s273 = scalar_lea.sflag [#allocation3], %s272
        %s274 = sand.u32 %s33, 1
        %s275 = smul.addr %s274, 32
        %s276 = scalar_lea.vmem [#allocation2], %s275
        %p277 = pneg %p46
        %p278 = pneg %p43
        %p279 = pneg %p67
        %p280 = pneg %p64
        %p281 = pneg %p88
        %p282 = pneg %p85
        %p283 = pneg %p109
        %p284 = pneg %p106
        %p285 = pneg %p130
        %p286 = pneg %p127
        %p287 = pneg %p156
        %p288 = pneg %p153
        %s289 = sand.u32 %s143, 1
        %s290 = scalar_lea.sflag [#allocation4], %s289
        %s291 = sand.u32 %s143, 1
        %s292 = smul.addr %s291, 24
        %s293 = scalar_lea.vmem [#allocation12], %s292
        %v294 = vld [vmem:[%s250] sm:$0xff]
        %s295 = scalar_lea.vmem %s250, 8 [#allocation2]
        %v296 = vld [vmem:[%s295] sm:$0xff]
        %s297 = scalar_lea.vmem %s250, 16 [#allocation2]
        %v298 = vld [vmem:[%s297] sm:$0xff]
        %s299 = scalar_lea.vmem %s250, 24 [#allocation2]
        %v300 = vld [vmem:[%s299] sm:$0xff]
        %s301 = sld [smem:[#allocation6]]
        %v302 = vstv %s301
        %v303 = vmul.f32 %v294, %v302
        %s304 = sld [smem:[#allocation7]]
        %v305 = vstv %s304
        %v306 = vadd.f32 %v303, %v305
        %s307 = sld [smem:[#allocation6 + $0xa]]
        %v308 = vstv %s307
        %v309 = vmul.f32 %v296, %v308
        %v310 = vadd.f32 %v306, %v309
        %s311 = sld [smem:[#allocation6 + $0x14]]
        %v312 = vstv %s311
        %v313 = vmul.f32 %v298, %v312
        %v314 = vadd.f32 %v310, %v313
        %s315 = sld [smem:[#allocation6 + $0x1e]]
        %v316 = vstv %s315
        %v317 = vmul.f32 %v300, %v316
        %v318 = vadd.f32 %v314, %v317
        %v319 = vtanh.pop %v318
        %s320 = sld [smem:[#allocation6 + $0x1]]
        %v321 = vstv %s320
        %v322 = vmul.f32 %v294, %v321
        %s323 = sld [smem:[#allocation7 + $0x1]]
        %v324 = vstv %s323
        %v325 = vadd.f32 %v322, %v324
        %s326 = sld [smem:[#allocation6 + $0xb]]
        %v327 = vstv %s326
        %v328 = vmul.f32 %v296, %v327
        %v329 = vadd.f32 %v325, %v328
        %s330 = sld [smem:[#allocation6 + $0x15]]
        %v331 = vstv %s330
        %v332 = vmul.f32 %v298, %v331
        %v333 = vadd.f32 %v329, %v332
        %s334 = sld [smem:[#allocation6 + $0x1f]]
        %v335 = vstv %s334
        %v336 = vmul.f32 %v300, %v335
        %v337 = vadd.f32 %v333, %v336
        %v338 = vtanh.pop %v337
        %s339 = sld [smem:[#allocation6 + $0x2]]
        %v340 = vstv %s339
        %v341 = vmul.f32 %v294, %v340
        %s342 = sld [smem:[#allocation7 + $0x2]]
        %v343 = vstv %s342
        %v344 = vadd.f32 %v341, %v343
        %s345 = sld [smem:[#allocation6 + $0xc]]
        %v346 = vstv %s345
        %v347 = vmul.f32 %v296, %v346
        %v348 = vadd.f32 %v344, %v347
        %s349 = sld [smem:[#allocation6 + $0x16]]
        %v350 = vstv %s349
        %v351 = vmul.f32 %v298, %v350
        %v352 = vadd.f32 %v348, %v351
        %s353 = sld [smem:[#allocation6 + $0x20]]
        %v354 = vstv %s353
        %v355 = vmul.f32 %v300, %v354
        %v356 = vadd.f32 %v352, %v355
        %v357 = vtanh.pop %v356
        %s358 = sld [smem:[#allocation6 + $0x3]]
        %v359 = vstv %s358
        %v360 = vmul.f32 %v294, %v359
        %s361 = sld [smem:[#allocation7 + $0x3]]
        %v362 = vstv %s361
        %v363 = vadd.f32 %v360, %v362
        %s364 = sld [smem:[#allocation6 + $0xd]]
        %v365 = vstv %s364
        %v366 = vmul.f32 %v296, %v365
        %v367 = vadd.f32 %v363, %v366
        %s368 = sld [smem:[#allocation6 + $0x17]]
        %v369 = vstv %s368
        %v370 = vmul.f32 %v298, %v369
        %v371 = vadd.f32 %v367, %v370
        %s372 = sld [smem:[#allocation6 + $0x21]]
        %v373 = vstv %s372
        %v374 = vmul.f32 %v300, %v373
        %v375 = vadd.f32 %v371, %v374
        %v376 = vtanh.pop %v375
        %s377 = sld [smem:[#allocation6 + $0x4]]
        %v378 = vstv %s377
        %v379 = vmul.f32 %v294, %v378
        %s380 = sld [smem:[#allocation7 + $0x4]]
        %v381 = vstv %s380
        %v382 = vadd.f32 %v379, %v381
        %s383 = sld [smem:[#allocation6 + $0xe]]
        %v384 = vstv %s383
        %v385 = vmul.f32 %v296, %v384
        %v386 = vadd.f32 %v382, %v385
        %s387 = sld [smem:[#allocation6 + $0x18]]
        %v388 = vstv %s387
        %v389 = vmul.f32 %v298, %v388
        %v390 = vadd.f32 %v386, %v389
        %s391 = sld [smem:[#allocation6 + $0x22]]
        %v392 = vstv %s391
        %v393 = vmul.f32 %v300, %v392
        %v394 = vadd.f32 %v390, %v393
        %v395 = vtanh.pop %v394
        %s396 = sld [smem:[#allocation6 + $0x5]]
        %v397 = vstv %s396
        %v398 = vmul.f32 %v294, %v397
        %s399 = sld [smem:[#allocation7 + $0x5]]
        %v400 = vstv %s399
        %v401 = vadd.f32 %v398, %v400
        %s402 = sld [smem:[#allocation6 + $0xf]]
        %v403 = vstv %s402
        %v404 = vmul.f32 %v296, %v403
        %v405 = vadd.f32 %v401, %v404
        %s406 = sld [smem:[#allocation6 + $0x19]]
        %v407 = vstv %s406
        %v408 = vmul.f32 %v298, %v407
        %v409 = vadd.f32 %v405, %v408
        %s410 = sld [smem:[#allocation6 + $0x23]]
        %v411 = vstv %s410
        %v412 = vmul.f32 %v300, %v411
        %v413 = vadd.f32 %v409, %v412
        %v414 = vtanh.pop %v413
        %s415 = sld [smem:[#allocation6 + $0x6]]
        %v416 = vstv %s415
        %v417 = vmul.f32 %v294, %v416
        %s418 = sld [smem:[#allocation7 + $0x6]]
        %v419 = vstv %s418
        %v420 = vadd.f32 %v417, %v419
        %s421 = sld [smem:[#allocation6 + $0x10]]
        %v422 = vstv %s421
        %v423 = vmul.f32 %v296, %v422
        %v424 = vadd.f32 %v420, %v423
        %s425 = sld [smem:[#allocation6 + $0x1a]]
        %v426 = vstv %s425
        %v427 = vmul.f32 %v298, %v426
        %v428 = vadd.f32 %v424, %v427
        %s429 = sld [smem:[#allocation6 + $0x24]]
        %v430 = vstv %s429
        %v431 = vmul.f32 %v300, %v430
        %v432 = vadd.f32 %v428, %v431
        %v433 = vtanh.pop %v432
        %s434 = sld [smem:[#allocation6 + $0x7]]
        %v435 = vstv %s434
        %v436 = vmul.f32 %v294, %v435
        %s437 = sld [smem:[#allocation7 + $0x7]]
        %v438 = vstv %s437
        %v439 = vadd.f32 %v436, %v438
        %s440 = sld [smem:[#allocation6 + $0x11]]
        %v441 = vstv %s440
        %v442 = vmul.f32 %v296, %v441
        %v443 = vadd.f32 %v439, %v442
        %s444 = sld [smem:[#allocation6 + $0x1b]]
        %v445 = vstv %s444
        %v446 = vmul.f32 %v298, %v445
        %v447 = vadd.f32 %v443, %v446
        %s448 = sld [smem:[#allocation6 + $0x25]]
        %v449 = vstv %s448
        %v450 = vmul.f32 %v300, %v449
        %v451 = vadd.f32 %v447, %v450
        %v452 = vtanh.pop %v451
        %s453 = sld [smem:[#allocation6 + $0x8]]
        %v454 = vstv %s453
        %v455 = vmul.f32 %v294, %v454
        %s456 = sld [smem:[#allocation7 + $0x8]]
        %v457 = vstv %s456
        %v458 = vadd.f32 %v455, %v457
        %s459 = sld [smem:[#allocation6 + $0x12]]
        %v460 = vstv %s459
        %v461 = vmul.f32 %v296, %v460
        %v462 = vadd.f32 %v458, %v461
        %s463 = sld [smem:[#allocation6 + $0x1c]]
        %v464 = vstv %s463
        %v465 = vmul.f32 %v298, %v464
        %v466 = vadd.f32 %v462, %v465
        %s467 = sld [smem:[#allocation6 + $0x26]]
        %v468 = vstv %s467
        %v469 = vmul.f32 %v300, %v468
        %v470 = vadd.f32 %v466, %v469
        %v471 = vtanh.pop %v470
        %s472 = sld [smem:[#allocation6 + $0x9]]
        %v473 = vstv %s472
        %v474 = vmul.f32 %v294, %v473
        %s475 = sld [smem:[#allocation7 + $0x9]]
        %v476 = vstv %s475
        %v477 = vadd.f32 %v474, %v476
        %s478 = sld [smem:[#allocation6 + $0x13]]
        %v479 = vstv %s478
        %v480 = vmul.f32 %v296, %v479
        %v481 = vadd.f32 %v477, %v480
        %s482 = sld [smem:[#allocation6 + $0x1d]]
        %v483 = vstv %s482
        %v484 = vmul.f32 %v298, %v483
        %v485 = vadd.f32 %v481, %v484
        %s486 = sld [smem:[#allocation6 + $0x27]]
        %v487 = vstv %s486
        %v488 = vmul.f32 %v300, %v487
        %v489 = vadd.f32 %v485, %v488
        %v490 = vtanh.pop %v489
        %s491 = sld [smem:[#allocation9]]
        %v492 = vstv %s491
        %v493 = vmul.f32 %v319, %v492
        %s494 = sld [smem:[#allocation10]]
        %v495 = vstv %s494
        %v496 = vadd.f32 %v493, %v495
        %s497 = sld [smem:[#allocation9 + $0x3]]
        %v498 = vstv %s497
        %v499 = vmul.f32 %v338, %v498
        %v500 = vadd.f32 %v496, %v499
        %s501 = sld [smem:[#allocation9 + $0x6]]
        %v502 = vstv %s501
        %v503 = vmul.f32 %v357, %v502
        %v504 = vadd.f32 %v500, %v503
        %s505 = sld [smem:[#allocation9 + $0x9]]
        %v506 = vstv %s505
        %v507 = vmul.f32 %v376, %v506
        %v508 = vadd.f32 %v504, %v507
        %s509 = sld [smem:[#allocation9 + $0xc]]
        %v510 = vstv %s509
        %v511 = vmul.f32 %v395, %v510
        %v512 = vadd.f32 %v508, %v511
        %s513 = sld [smem:[#allocation9 + $0xf]]
        %v514 = vstv %s513
        %v515 = vmul.f32 %v414, %v514
        %v516 = vadd.f32 %v512, %v515
        %s517 = sld [smem:[#allocation9 + $0x12]]
        %v518 = vstv %s517
        %v519 = vmul.f32 %v433, %v518
        %v520 = vadd.f32 %v516, %v519
        %s521 = sld [smem:[#allocation9 + $0x15]]
        %v522 = vstv %s521
        %v523 = vmul.f32 %v452, %v522
        %v524 = vadd.f32 %v520, %v523
        %s525 = sld [smem:[#allocation9 + $0x18]]
        %v526 = vstv %s525
        %v527 = vmul.f32 %v471, %v526
        %v528 = vadd.f32 %v524, %v527
        %s529 = sld [smem:[#allocation9 + $0x1b]]
        %v530 = vstv %s529
        %v531 = vmul.f32 %v490, %v530
        %v532 = vadd.f32 %v528, %v531
        %s533 = sld [smem:[#allocation9 + $0x1]]
        %v534 = vstv %s533
        %v535 = vmul.f32 %v319, %v534
        %s536 = sld [smem:[#allocation10 + $0x1]]
        %v537 = vstv %s536
        %v538 = vadd.f32 %v535, %v537
        %s539 = sld [smem:[#allocation9 + $0x4]]
        %v540 = vstv %s539
        %v541 = vmul.f32 %v338, %v540
        %v542 = vadd.f32 %v538, %v541
        %s543 = sld [smem:[#allocation9 + $0x7]]
        %v544 = vstv %s543
        %v545 = vmul.f32 %v357, %v544
        %v546 = vadd.f32 %v542, %v545
        %s547 = sld [smem:[#allocation9 + $0xa]]
        %v548 = vstv %s547
        %v549 = vmul.f32 %v376, %v548
        %v550 = vadd.f32 %v546, %v549
        %s551 = sld [smem:[#allocation9 + $0xd]]
        %v552 = vstv %s551
        %v553 = vmul.f32 %v395, %v552
        %v554 = vadd.f32 %v550, %v553
        %s555 = sld [smem:[#allocation9 + $0x10]]
        %v556 = vstv %s555
        %v557 = vmul.f32 %v414, %v556
        %v558 = vadd.f32 %v554, %v557
        %s559 = sld [smem:[#allocation9 + $0x13]]
        %v560 = vstv %s559
        %v561 = vmul.f32 %v433, %v560
        %v562 = vadd.f32 %v558, %v561
        %s563 = sld [smem:[#allocation9 + $0x16]]
        %v564 = vstv %s563
        %v565 = vmul.f32 %v452, %v564
        %v566 = vadd.f32 %v562, %v565
        %s567 = sld [smem:[#allocation9 + $0x19]]
        %v568 = vstv %s567
        %v569 = vmul.f32 %v471, %v568
        %v570 = vadd.f32 %v566, %v569
        %s571 = sld [smem:[#allocation9 + $0x1c]]
        %v572 = vstv %s571
        %v573 = vmul.f32 %v490, %v572
        %v574 = vadd.f32 %v570, %v573
        %s575 = sld [smem:[#allocation9 + $0x2]]
        %v576 = vstv %s575
        %v577 = vmul.f32 %v319, %v576
        %s578 = sld [smem:[#allocation10 + $0x2]]
        %v579 = vstv %s578
        %v580 = vadd.f32 %v577, %v579
        %s581 = sld [smem:[#allocation9 + $0x5]]
        %v582 = vstv %s581
        %v583 = vmul.f32 %v338, %v582
        %v584 = vadd.f32 %v580, %v583
        %s585 = sld [smem:[#allocation9 + $0x8]]
        %v586 = vstv %s585
        %v587 = vmul.f32 %v357, %v586
        %v588 = vadd.f32 %v584, %v587
        %s589 = sld [smem:[#allocation9 + $0xb]]
        %v590 = vstv %s589
        %v591 = vmul.f32 %v376, %v590
        %v592 = vadd.f32 %v588, %v591
        %s593 = sld [smem:[#allocation9 + $0xe]]
        %v594 = vstv %s593
        %v595 = vmul.f32 %v395, %v594
        %v596 = vadd.f32 %v592, %v595
        %s597 = sld [smem:[#allocation9 + $0x11]]
        %v598 = vstv %s597
        %v599 = vmul.f32 %v414, %v598
        %v600 = vadd.f32 %v596, %v599
        %s601 = sld [smem:[#allocation9 + $0x14]]
        %v602 = vstv %s601
        %v603 = vmul.f32 %v433, %v602
        %v604 = vadd.f32 %v600, %v603
        %s605 = sld [smem:[#allocation9 + $0x17]]
        %v606 = vstv %s605
        %v607 = vmul.f32 %v452, %v606
        %v608 = vadd.f32 %v604, %v607
        %s609 = sld [smem:[#allocation9 + $0x1a]]
        %v610 = vstv %s609
        %v611 = vmul.f32 %v471, %v610
        %v612 = vadd.f32 %v608, %v611
        %s613 = sld [smem:[#allocation9 + $0x1d]]
        %v614 = vstv %s613
        %v615 = vmul.f32 %v490, %v614
        %v616 = vadd.f32 %v612, %v615
        %v617 = vmax.f32 %v532, %v574
        %v618 = vmax.f32 %v617, %v616
        %v619 = vsub.f32 %v532, %v618
        %v620 = vmul.f32 %v619, 1.442695
        %v621 = vpow.pop %v620
        %v622 = vsub.f32 %v574, %v618
        %v623 = vmul.f32 %v622, 1.442695
        %v624 = vpow.pop %v623
        %v625 = vsub.f32 %v616, %v618
        %v626 = vmul.f32 %v625, 1.442695
        %v627 = vpow.pop %v626
        %v628 = vadd.f32 %v621, %v624
        %v629 = vadd.f32 %v628, %v627
        %v630 = vrcp.pop %v629
        %v631 = vmul.f32 %v621, %v630
        %632 = vst [vmem:[%s293] sm:$0xff] %v631
        %v633 = vmul.f32 %v624, %v630
        %s634 = scalar_lea.vmem %s293, 8 [#allocation12]
        %635 = vst [vmem:[%s634] sm:$0xff] %v633
        %v636 = vmul.f32 %v627, %v630
        %s637 = scalar_lea.vmem %s293, 16 [#allocation12]
        %638 = vst [vmem:[%s637] sm:$0xff] %v636
        %s639 = sand.u32 %s143, 1
        %s640 = scalar_lea.sflag [#allocation4], %s639
        %s641 = sand.u32 %s143, 1
        %s642 = smul.addr %s641, 24
        %s643 = scalar_lea.vmem [#allocation12], %s642
        // Predicated region
        $region61: #{tpu_custom_call.1} parent=39 // pred_check
          %p644 = pneg %p153
        $region62: #{tpu_custom_call.1} parent=39 // pred_check_branch
          %646 = sbr.rel (%p644) target = $region64
        $region63: #{tpu_custom_call.1} parent=39 // pred_region
          %s648 = ssub.s32 384, 384
          %649 = vsyncadd %s640, %s648
          %s650 = smul.addr %s25, 128
          %s651 = scalar_lea.hbm %s5, %s650
          %s652 = sshll.u32 %s643, 4
          %s653 = int_to_ptr.vmem [resolvable:$true] %s652
          %658 = dma.vmem_to_hbm [thread:$0]  %s653, 384, %s651, %s640, 128, 256, 8
        $region64: #{tpu_custom_call.1} parent=39 // pred_fallthru
          _
      $region40: #{tpu_custom_call.1} parent=5 // pred_fallthru
        _
      %p659 = scmp.le.s32.totalorder 2, %s20
      // Predicated region
      $region65: #{tpu_custom_call.1} parent=5 // pred_check
        %p660 = pneg %p659
      $region66: #{tpu_custom_call.1} parent=5 // pred_check_branch
        %662 = sbr.rel (%p660) target = $region68
      $region67: #{tpu_custom_call.1} parent=5 // pred_region
        %s663 = ssub.s32 %s20, 2
        // Predicated region
        $region69: #{tpu_custom_call.1} parent=67 // pred_check
          %p664 = pneg %p159
        $region70: #{tpu_custom_call.1} parent=67 // pred_check_branch
          %666 = sbr.rel (%p664) target = $region72
        $region71: #{tpu_custom_call.1} parent=67 // pred_region
          %s667 = sand.u32 %s144, 1
          %s668 = scalar_lea.sflag [#allocation4], %s667
          %s669 = sand.u32 %s144, 1
          %s670 = smul.addr %s669, 24
          %s671 = scalar_lea.vmem [#allocation12], %s670
          %672 = dma.done %s668, 384
        $region72: #{tpu_custom_call.1} parent=67 // pred_fallthru
          _
      $region68: #{tpu_custom_call.1} parent=5 // pred_fallthru
        _
    $region6: #{tpu_custom_call.1} parent=1 // loop_footer
      %s24 = sadd.s32 1, %s20
    $region7: #{tpu_custom_call.1} parent=1 // loop_footer_branch
      %19 = sbr.rel target = $region3
    $region8: #{tpu_custom_call.1} parent=1 // loop_exit
      _
    %673 = vsyncpa [#allocation3], 1
    %s674 = scalar_lea.sflag [#allocation3], 1
    %675 = vsyncpa %s674, 1
    %676 = vsyncpa [#allocation4], 1
    %s677 = scalar_lea.sflag [#allocation4], 1
    %678 = vsyncpa %s677, 1
    %679 = vsyncpa [#allocation5], 1
    %s680 = scalar_lea.sflag [#allocation5], 1
    %681 = vsyncpa %s680, 1
    %682 = vsyncpa [#allocation8], 1
    %683 = vsyncpa [#allocation11], 1

</llo_original>
